<compile_context>
chip_gen: v5e
topology: v5e:2x2
jax: 0.10.0
libtpu: 0.0.40
codegen_flags: <defaults>
</compile_context>

<pallas_src>
import functools

import jax
import jax.numpy as jnp
from jax.experimental import pallas as pl
from jax.experimental.pallas import tpu as pltpu

TREF = 10.0
T0_CONST = 46.02
INV_TREF_T0 = 1.0 / (TREF - T0_CONST)

# Architecture (small, consistent with the module's __init__):
INPUT_DIM = 8            # x has 7 features, b contributes 1 (concat -> 8)
LATENT_DIM = 16
ENCODER_DIMS = [32, 32]
DECODER_DIMS = [32, 32]
BATCH = 16

IN_W = INPUT_DIM + 1               # x(7) | b(1) | T(1)  -> 9
DEC_W = 3 * DECODER_DIMS[-1]       # fused decoder width -> 96
OUT_W = 24                         # packed output lanes: nee|dTdt|k0|k1|f|pad(3)|z(16)
Z_OFF = 8                          # z starts at lane 8
BIAS_ROWS = 8                      # 6 bias rows + slope96 row + slope4 row


def penn_kernel(inp_ref, we1_ref, we2_ref, we3_ref,
                wzd1_ref, wd2_ref, wd3_ref, bias_ref, out_ref,
                *, use_bf16=False):
    relu = lambda v: jnp.maximum(v, 0.0)
    cdt = jnp.bfloat16 if use_bf16 else jnp.float32

    def mm(a, w_ref):
        # fp32 accumulation regardless of operand dtype
        return jnp.dot(a.astype(cdt), w_ref[...].astype(cdt),
                       preferred_element_type=jnp.float32)

    inp = inp_ref[...]                         # (TB, 9): x | b | T
    tb = inp.shape[0]
    T = inp[:, 8:9]                            # (TB, 1)

    bias = bias_ref[...]                       # (8, 96)
    slope96 = bias[6:7, :]                     # 0.0 on ReLU lanes, 0.01 on LeakyReLU lanes
    slope4 = bias[7:8, 0:4]                    # [1, 1, 0.01, 0.01]: final act only on k lanes

    # --- encoder: Linear+ReLU, Linear+ReLU ---
    # (we1 has a zero row for the T lane, so T does not feed the MLP)
    h = relu(mm(inp, we1_ref) + bias[0:1, 0:ENCODER_DIMS[0]])
    h = relu(mm(h, we2_ref) + bias[1:2, 0:ENCODER_DIMS[1]])        # (TB, 32)

    # latent z (output only): encoder layer 3 applied to h
    z = mm(h, we3_ref) + bias[2:3, 0:LATENT_DIM]                   # (TB, 16)

    # --- fused decoders, with encoder layer 3 folded into layer 1 offline ---
    # lanes [0,32): nee branch (ReLU), [32,64): temp branch (ReLU),
    # lanes [64,96): k branch (LeakyReLU 0.01)
    mixed_act = lambda v: jnp.where(v >= 0.0, v, slope96 * v)

    hd = mixed_act(mm(h, wzd1_ref) + bias[3:4, 0:DEC_W])
    hd = mixed_act(mm(hd, wd2_ref) + bias[4:5, 0:DEC_W])
    d3 = mm(hd, wd3_ref) + bias[5:6, 0:4]                          # (TB, 4): nee|dTdt|k0|k1

    # final LeakyReLU only on the k lanes (slope4 = 1 on nee/dTdt lanes)
    d3 = jnp.where(d3 >= 0.0, d3, slope4 * d3)

    dT_dt = d3[:, 1:2]
    E0 = d3[:, 2:3]
    rb = d3[:, 3:4]

    # --- physics model (exact reciprocal; EUP has slack) ---
    inv_TmT0 = pl.reciprocal(T - T0_CONST)
    exp_term = jnp.exp(E0 * (INV_TREF_T0 - inv_TmT0))
    f = rb * E0 * (inv_TmT0 * inv_TmT0) * exp_term * dT_dt

    # --- single full-block lane-dense store ---
    out_ref[...] = jnp.concatenate(
        [d3, f, jnp.zeros((tb, Z_OFF - 5), jnp.float32), z], axis=1)


def make_linear(key, in_dim, out_dim):
    """Deterministic init mimicking nn.Linear defaults (uniform +-1/sqrt(in))."""
    kw, kb = jax.random.split(key)
    bound = 1.0 / jnp.sqrt(jnp.float32(in_dim))
    w = jax.random.uniform(kw, (in_dim, out_dim), jnp.float32, -bound, bound)
    b = jax.random.uniform(kb, (1, out_dim), jnp.float32, -bound, bound)
    return w, b


def init_params(key):
    keys = jax.random.split(key, 12)
    p = {}
    # encoder: 8 -> 32 -> 32 -> 16
    p['we1'], p['be1'] = make_linear(keys[0], INPUT_DIM, ENCODER_DIMS[0])
    p['we2'], p['be2'] = make_linear(keys[1], ENCODER_DIMS[0], ENCODER_DIMS[1])
    p['we3'], p['be3'] = make_linear(keys[2], ENCODER_DIMS[1], LATENT_DIM)
    # nee decoder: 16 -> 32 -> 32 -> 1
    p['wn1'], p['bn1'] = make_linear(keys[3], LATENT_DIM, DECODER_DIMS[0])
    p['wn2'], p['bn2'] = make_linear(keys[4], DECODER_DIMS[0], DECODER_DIMS[1])
    p['wn3'], p['bn3'] = make_linear(keys[5], DECODER_DIMS[1], 1)
    # temp derivative decoder: 16 -> 32 -> 32 -> 1
    p['wt1'], p['bt1'] = make_linear(keys[6], LATENT_DIM, DECODER_DIMS[0])
    p['wt2'], p['bt2'] = make_linear(keys[7], DECODER_DIMS[0], DECODER_DIMS[1])
    p['wt3'], p['bt3'] = make_linear(keys[8], DECODER_DIMS[1], 1)
    # k decoder: 16 -> 32 -> 32 -> 2
    p['wk1'], p['bk1'] = make_linear(keys[9], LATENT_DIM, DECODER_DIMS[0])
    p['wk2'], p['bk2'] = make_linear(keys[10], DECODER_DIMS[0], DECODER_DIMS[1])
    p['wk3'], p['bk3'] = make_linear(keys[11], DECODER_DIMS[1], 2)
    return p


def pack_params(P):
    """Fuse / pack the 24 per-layer tensors into 7 kernel operands."""
    z = lambda r, c: jnp.zeros((r, c), jnp.float32)

    # encoder layer 1: add a zero row for the T lane of the packed input
    we1p = jnp.concatenate([P['we1'], z(1, ENCODER_DIMS[0])], axis=0)      # (9, 32)

    # fused decoder layer 1 + fold encoder layer 3 into it
    wd1 = jnp.concatenate([P['wn1'], P['wt1'], P['wk1']], axis=1)          # (16, 96)
    bd1 = jnp.concatenate([P['bn1'], P['bt1'], P['bk1']], axis=1)          # (1, 96)
    wzd1 = P['we3'] @ wd1                                                  # (32, 96)
    bzd1 = P['be3'] @ wd1 + bd1                                            # (1, 96)

    def block_diag3(a, b_, c):
        r = a.shape[0]
        ka, kb, kc = a.shape[1], b_.shape[1], c.shape[1]
        row1 = jnp.concatenate([a, z(r, kb), z(r, kc)], axis=1)
        row2 = jnp.concatenate([z(r, ka), b_, z(r, kc)], axis=1)
        row3 = jnp.concatenate([z(r, ka), z(r, kb), c], axis=1)
        return jnp.concatenate([row1, row2, row3], axis=0)

    wd2 = block_diag3(P['wn2'], P['wt2'], P['wk2'])                        # (96, 96)
    wd3 = block_diag3(P['wn3'], P['wt3'], P['wk3'])                        # (96, 4)

    def pad_row(v, width=DEC_W):
        v = v.reshape(1, -1)
        return jnp.pad(v, ((0, 0), (0, width - v.shape[1])))

    # precomputed activation-slope rows (no per-step iota/compare in kernel)
    lane = jnp.arange(DEC_W)
    slope96 = jnp.where(lane < 2 * DECODER_DIMS[-1], 0.0, 0.01)
    slope96 = slope96.reshape(1, -1).astype(jnp.float32)                   # (1, 96)
    slope4 = jnp.array([[1.0, 1.0, 0.01, 0.01]], jnp.float32)              # (1, 4)

    bias = jnp.concatenate([
        pad_row(P['be1']), pad_row(P['be2']), pad_row(P['be3']),
        pad_row(bzd1),
        pad_row(jnp.concatenate([P['bn2'], P['bt2'], P['bk2']], axis=1)),
        pad_row(jnp.concatenate([P['bn3'], P['bt3'], P['bk3']], axis=1)),
        slope96,
        pad_row(slope4),
    ], axis=0)                                                             # (8, 96)
    assert bias.shape == (BIAS_ROWS, DEC_W)

    return {'we1': we1p, 'we2': P['we2'], 'we3': P['we3'],
            'wzd1': wzd1, 'wd2': wd2, 'wd3': wd3, 'bias': bias}


PACKED_ORDER = ('we1', 'we2', 'we3', 'wzd1', 'wd2', 'wd3', 'bias')


def _round_up(a, m):
    return ((a + m - 1) // m) * m


@jax.jit
def penn_forward(x, b, T, packed):
    N = x.shape[0]
    inp = jnp.concatenate(
        [x.astype(jnp.float32),
         b.reshape(N, 1).astype(jnp.float32),
         T.reshape(N, 1).astype(jnp.float32)], axis=1)                    # (N, 9)

    # Tile selection:
    #  - small N: whole problem in one tile (grid=(1,))
    #  - larger N: at least 2 "parallel" grid steps (v7x dual-TC), tiles up to
    #    2048 rows (amortizes the ~0.35 us/step overhead; ~4-5 MiB VMEM max)
    if N <= 256:
        tb = _round_up(max(N, 8), 8)
    else:
        tb = min(2048, _round_up(-(-N // 2), 256))
    Np = _round_up(N, tb)
    if Np != N:
        inp = jnp.pad(inp, ((0, Np - N), (0, 0)))

    # bf16 matmul operands once MXU-bound (v6e/v7x lever; fp32 accumulation).
    use_bf16 = Np >= 1024

    plist = [packed[k] for k in PACKED_ORDER]
    param_specs = [pl.BlockSpec(p.shape, lambda i: (0, 0)) for p in plist]
    in_specs = [pl.BlockSpec((tb, IN_W), lambda i: (i, 0))] + param_specs
    out_specs = pl.BlockSpec((tb, OUT_W), lambda i: (i, 0))

    out = pl.pallas_call(
        functools.partial(penn_kernel, use_bf16=use_bf16),
        grid=(Np // tb,),
        in_specs=in_specs,
        out_specs=out_specs,
        out_shape=jax.ShapeDtypeStruct((Np, OUT_W), jnp.float32),
        compiler_params=pltpu.CompilerParams(dimension_semantics=("parallel",)),
    )(inp, *plist)

    nee = out[:N, 0:1]
    dT_dt = out[:N, 1:2]
    k_pred = out[:N, 2:4]
    f = out[:N, 4:5]
    z_lat = out[:N, Z_OFF:Z_OFF + LATENT_DIM]
    return nee, dT_dt, k_pred, f, z_lat


def ref_forward(x, b, T, P):
    """Plain-JAX reference mirroring the PyTorch module, for validation."""
    relu = lambda v: jnp.maximum(v, 0.0)
    lrelu = lambda v: jnp.where(v >= 0.0, v, 0.01 * v)
    lin = lambda h, w, bb: h @ w + bb

    inp = jnp.concatenate([x, b.reshape(-1, 1)], axis=1)
    h = relu(lin(inp, P['we1'], P['be1']))
    h = relu(lin(h, P['we2'], P['be2']))
    z = lin(h, P['we3'], P['be3'])

    h = relu(lin(z, P['wn1'], P['bn1']))
    h = relu(lin(h, P['wn2'], P['bn2']))
    nee = lin(h, P['wn3'], P['bn3'])

    h = relu(lin(z, P['wt1'], P['bt1']))
    h = relu(lin(h, P['wt2'], P['bt2']))
    dT_dt = lin(h, P['wt3'], P['bt3'])

    h = lrelu(lin(z, P['wk1'], P['bk1']))
    h = lrelu(lin(h, P['wk2'], P['bk2']))
    k = lrelu(lin(h, P['wk3'], P['bk3']))

    Tc = T.reshape(-1, 1)
    E0 = k[:, 0:1]
    rb = k[:, 1:2]
    exp_term = jnp.exp(E0 * (1.0 / (TREF - T0_CONST) - 1.0 / (Tc - T0_CONST)))
    dNEE_dT = rb * (E0 / (Tc - T0_CONST) ** 2) * exp_term
    f = dNEE_dT * dT_dt
    return nee, dT_dt, k, f, z


if __name__ == "__main__":
    key = jax.random.PRNGKey(0)
    kp, kx, kb, kt = jax.random.split(key, 4)

    params = init_params(kp)
    x = jax.random.normal(kx, (BATCH, INPUT_DIM - 1), jnp.float32)
    b = jax.random.normal(kb, (BATCH,), jnp.float32)
    T = jax.random.uniform(kt, (BATCH,), jnp.float32, 0.0, 30.0)

    packed = pack_params(params)
    outs = penn_forward(x, b, T, packed)
    outs = jax.block_until_ready(outs)

    refs = ref_forward(x, b, T, params)
    names = ["nee", "dT_dt", "k_pred", "f", "z"]
    for name, got, want in zip(names, outs, refs):
        assert got.shape == want.shape, (name, got.shape, want.shape)
        # small slack for the offline we3@wd1 fold (fp32 re-association only)
        assert jnp.allclose(got, want, rtol=2e-4, atol=2e-5), name

    print("KERNEL_OK")
</pallas_src>

<mosaic_0001>
module attributes {stable_mosaic.version = 11 : i64} {
  func.func @penn_kernel(%arg0: i32, %arg1: memref<16x9xf32, #tpu.memory_space<vmem>>, %arg2: memref<9x32xf32, #tpu.memory_space<vmem>>, %arg3: memref<32x32xf32, #tpu.memory_space<vmem>>, %arg4: memref<32x16xf32, #tpu.memory_space<vmem>>, %arg5: memref<32x96xf32, #tpu.memory_space<vmem>>, %arg6: memref<96x96xf32, #tpu.memory_space<vmem>>, %arg7: memref<96x4xf32, #tpu.memory_space<vmem>>, %arg8: memref<8x96xf32, #tpu.memory_space<vmem>>, %arg9: memref<16x24xf32, #tpu.memory_space<vmem>>) attributes {dimension_semantics = [#tpu.dimension_semantics<parallel>], iteration_bounds = array<i64: 1>, scalar_prefetch = 0 : i64, scratch_operands = 0 : i64, tpu.core_type = #tpu.core_type<tc>, window_params = [{transform_indices = @transform_0, window_bounds = array<i64: 16, 9>}, {pipeline_mode = #tpu.pipeline_mode<synchronous>, transform_indices = @transform_1, window_bounds = array<i64: 9, 32>}, {pipeline_mode = #tpu.pipeline_mode<synchronous>, transform_indices = @transform_2, window_bounds = array<i64: 32, 32>}, {pipeline_mode = #tpu.pipeline_mode<synchronous>, transform_indices = @transform_3, window_bounds = array<i64: 32, 16>}, {pipeline_mode = #tpu.pipeline_mode<synchronous>, transform_indices = @transform_4, window_bounds = array<i64: 32, 96>}, {pipeline_mode = #tpu.pipeline_mode<synchronous>, transform_indices = @transform_5, window_bounds = array<i64: 96, 96>}, {pipeline_mode = #tpu.pipeline_mode<synchronous>, transform_indices = @transform_6, window_bounds = array<i64: 96, 4>}, {pipeline_mode = #tpu.pipeline_mode<synchronous>, transform_indices = @transform_7, window_bounds = array<i64: 8, 96>}, {transform_indices = @transform_8, window_bounds = array<i64: 16, 24>}]} {
    %c0 = arith.constant 0 : index
    %c0_0 = arith.constant 0 : index
    %0 = vector.load %arg1[%c0, %c0_0] : memref<16x9xf32, #tpu.memory_space<vmem>>, vector<16x9xf32>
    %1 = vector.extract_strided_slice %0 {offsets = [0, 8], sizes = [16, 1], strides = [1, 1]} : vector<16x9xf32> to vector<16x1xf32>
    %c0_1 = arith.constant 0 : index
    %c0_2 = arith.constant 0 : index
    %2 = vector.load %arg8[%c0_1, %c0_2] : memref<8x96xf32, #tpu.memory_space<vmem>>, vector<8x96xf32>
    %3 = vector.extract_strided_slice %2 {offsets = [6, 0], sizes = [1, 96], strides = [1, 1]} : vector<8x96xf32> to vector<1x96xf32>
    %4 = vector.extract_strided_slice %2 {offsets = [7, 0], sizes = [1, 4], strides = [1, 1]} : vector<8x96xf32> to vector<1x4xf32>
    %c0_3 = arith.constant 0 : index
    %c0_4 = arith.constant 0 : index
    %5 = vector.load %arg2[%c0_3, %c0_4] : memref<9x32xf32, #tpu.memory_space<vmem>>, vector<9x32xf32>
    %cst = arith.constant dense<0.000000e+00> : vector<16x32xf32>
    %6 = tpu.matmul %0, %5, %cst {dimension_numbers = #tpu.dot_dimension_numbers<[1], [0], [0], [1], [0, 0, 1, 1], [], []>} : vector<16x9xf32>, vector<9x32xf32>, vector<16x32xf32> -> vector<16x32xf32>
    %7 = vector.extract_strided_slice %2 {offsets = [0, 0], sizes = [1, 32], strides = [1, 1]} : vector<8x96xf32> to vector<1x32xf32>
    %8 = vector.broadcast %7 : vector<1x32xf32> to vector<16x32xf32>
    %9 = arith.addf %6, %8 : vector<16x32xf32>
    %cst_5 = arith.constant 0.000000e+00 : f32
    %10 = vector.broadcast %cst_5 : f32 to vector<16x32xf32>
    %11 = arith.maximumf %9, %10 : vector<16x32xf32>
    %c0_6 = arith.constant 0 : index
    %c0_7 = arith.constant 0 : index
    %12 = vector.load %arg3[%c0_6, %c0_7] : memref<32x32xf32, #tpu.memory_space<vmem>>, vector<32x32xf32>
    %cst_8 = arith.constant dense<0.000000e+00> : vector<16x32xf32>
    %13 = tpu.matmul %11, %12, %cst_8 {dimension_numbers = #tpu.dot_dimension_numbers<[1], [0], [0], [1], [0, 0, 1, 1], [], []>} : vector<16x32xf32>, vector<32x32xf32>, vector<16x32xf32> -> vector<16x32xf32>
    %14 = vector.extract_strided_slice %2 {offsets = [1, 0], sizes = [1, 32], strides = [1, 1]} : vector<8x96xf32> to vector<1x32xf32>
    %15 = vector.broadcast %14 : vector<1x32xf32> to vector<16x32xf32>
    %16 = arith.addf %13, %15 : vector<16x32xf32>
    %cst_9 = arith.constant 0.000000e+00 : f32
    %17 = vector.broadcast %cst_9 : f32 to vector<16x32xf32>
    %18 = arith.maximumf %16, %17 : vector<16x32xf32>
    %c0_10 = arith.constant 0 : index
    %c0_11 = arith.constant 0 : index
    %19 = vector.load %arg4[%c0_10, %c0_11] : memref<32x16xf32, #tpu.memory_space<vmem>>, vector<32x16xf32>
    %cst_12 = arith.constant dense<0.000000e+00> : vector<16x16xf32>
    %20 = tpu.matmul %18, %19, %cst_12 {dimension_numbers = #tpu.dot_dimension_numbers<[1], [0], [0], [1], [0, 0, 1, 1], [], []>} : vector<16x32xf32>, vector<32x16xf32>, vector<16x16xf32> -> vector<16x16xf32>
    %21 = vector.extract_strided_slice %2 {offsets = [2, 0], sizes = [1, 16], strides = [1, 1]} : vector<8x96xf32> to vector<1x16xf32>
    %22 = vector.broadcast %21 : vector<1x16xf32> to vector<16x16xf32>
    %23 = arith.addf %20, %22 : vector<16x16xf32>
    %c0_13 = arith.constant 0 : index
    %c0_14 = arith.constant 0 : index
    %24 = vector.load %arg5[%c0_13, %c0_14] : memref<32x96xf32, #tpu.memory_space<vmem>>, vector<32x96xf32>
    %cst_15 = arith.constant dense<0.000000e+00> : vector<16x96xf32>
    %25 = tpu.matmul %18, %24, %cst_15 {dimension_numbers = #tpu.dot_dimension_numbers<[1], [0], [0], [1], [0, 0, 1, 1], [], []>} : vector<16x32xf32>, vector<32x96xf32>, vector<16x96xf32> -> vector<16x96xf32>
    %26 = vector.extract_strided_slice %2 {offsets = [3, 0], sizes = [1, 96], strides = [1, 1]} : vector<8x96xf32> to vector<1x96xf32>
    %27 = vector.broadcast %26 : vector<1x96xf32> to vector<16x96xf32>
    %28 = arith.addf %25, %27 : vector<16x96xf32>
    %cst_16 = arith.constant 0.000000e+00 : f32
    %29 = vector.broadcast %cst_16 : f32 to vector<16x96xf32>
    %30 = arith.cmpf oge, %28, %29 : vector<16x96xf32>
    %31 = vector.broadcast %3 : vector<1x96xf32> to vector<16x96xf32>
    %32 = arith.mulf %31, %28 : vector<16x96xf32>
    %33 = arith.select %30, %28, %32 : vector<16x96xi1>, vector<16x96xf32>
    %c0_17 = arith.constant 0 : index
    %c0_18 = arith.constant 0 : index
    %34 = vector.load %arg6[%c0_17, %c0_18] : memref<96x96xf32, #tpu.memory_space<vmem>>, vector<96x96xf32>
    %cst_19 = arith.constant dense<0.000000e+00> : vector<16x96xf32>
    %35 = tpu.matmul %33, %34, %cst_19 {dimension_numbers = #tpu.dot_dimension_numbers<[1], [0], [0], [1], [0, 0, 1, 1], [], []>} : vector<16x96xf32>, vector<96x96xf32>, vector<16x96xf32> -> vector<16x96xf32>
    %36 = vector.extract_strided_slice %2 {offsets = [4, 0], sizes = [1, 96], strides = [1, 1]} : vector<8x96xf32> to vector<1x96xf32>
    %37 = vector.broadcast %36 : vector<1x96xf32> to vector<16x96xf32>
    %38 = arith.addf %35, %37 : vector<16x96xf32>
    %cst_20 = arith.constant 0.000000e+00 : f32
    %39 = vector.broadcast %cst_20 : f32 to vector<16x96xf32>
    %40 = arith.cmpf oge, %38, %39 : vector<16x96xf32>
    %41 = vector.broadcast %3 : vector<1x96xf32> to vector<16x96xf32>
    %42 = arith.mulf %41, %38 : vector<16x96xf32>
    %43 = arith.select %40, %38, %42 : vector<16x96xi1>, vector<16x96xf32>
    %c0_21 = arith.constant 0 : index
    %c0_22 = arith.constant 0 : index
    %44 = vector.load %arg7[%c0_21, %c0_22] : memref<96x4xf32, #tpu.memory_space<vmem>>, vector<96x4xf32>
    %cst_23 = arith.constant dense<0.000000e+00> : vector<16x4xf32>
    %45 = tpu.matmul %43, %44, %cst_23 {dimension_numbers = #tpu.dot_dimension_numbers<[1], [0], [0], [1], [0, 0, 1, 1], [], []>} : vector<16x96xf32>, vector<96x4xf32>, vector<16x4xf32> -> vector<16x4xf32>
    %46 = vector.extract_strided_slice %2 {offsets = [5, 0], sizes = [1, 4], strides = [1, 1]} : vector<8x96xf32> to vector<1x4xf32>
    %47 = vector.broadcast %46 : vector<1x4xf32> to vector<16x4xf32>
    %48 = arith.addf %45, %47 : vector<16x4xf32>
    %cst_24 = arith.constant 0.000000e+00 : f32
    %49 = vector.broadcast %cst_24 : f32 to vector<16x4xf32>
    %50 = arith.cmpf oge, %48, %49 : vector<16x4xf32>
    %51 = vector.broadcast %4 : vector<1x4xf32> to vector<16x4xf32>
    %52 = arith.mulf %51, %48 : vector<16x4xf32>
    %53 = arith.select %50, %48, %52 : vector<16x4xi1>, vector<16x4xf32>
    %54 = vector.extract_strided_slice %53 {offsets = [0, 1], sizes = [16, 1], strides = [1, 1]} : vector<16x4xf32> to vector<16x1xf32>
    %55 = vector.extract_strided_slice %53 {offsets = [0, 2], sizes = [16, 1], strides = [1, 1]} : vector<16x4xf32> to vector<16x1xf32>
    %56 = vector.extract_strided_slice %53 {offsets = [0, 3], sizes = [16, 1], strides = [1, 1]} : vector<16x4xf32> to vector<16x1xf32>
    %cst_25 = arith.constant 4.602000e+01 : f32
    %57 = vector.broadcast %cst_25 : f32 to vector<16x1xf32>
    %58 = arith.subf %1, %57 : vector<16x1xf32>
    %59 = tpu.reciprocal %58 : vector<16x1xf32> -> vector<16x1xf32>
    %cst_26 = arith.constant -0.0277623534 : f32
    %60 = vector.broadcast %cst_26 : f32 to vector<16x1xf32>
    %61 = arith.subf %60, %59 : vector<16x1xf32>
    %62 = arith.mulf %55, %61 : vector<16x1xf32>
    %63 = math.exp %62 : vector<16x1xf32>
    %64 = arith.mulf %56, %55 : vector<16x1xf32>
    %65 = arith.mulf %59, %59 : vector<16x1xf32>
    %66 = arith.mulf %64, %65 : vector<16x1xf32>
    %67 = arith.mulf %66, %63 : vector<16x1xf32>
    %68 = arith.mulf %67, %54 : vector<16x1xf32>
    %cst_27 = arith.constant 0.000000e+00 : f32
    %69 = vector.broadcast %cst_27 : f32 to vector<16x3xf32>
    %70 = tpu.concatenate %53, %68, %69, %23 in 1 : vector<16x4xf32>, vector<16x1xf32>, vector<16x3xf32>, vector<16x16xf32> -> vector<16x24xf32>
    %c0_28 = arith.constant 0 : index
    %c0_29 = arith.constant 0 : index
    %71 = vector.load %arg9[%c0_28, %c0_29] : memref<16x24xf32, #tpu.memory_space<vmem>>, vector<16x24xf32>
    tpu.vector_store %arg9[%c0_28, %c0_29], %70 {strides = array<i32>} : memref<16x24xf32, #tpu.memory_space<vmem>>, vector<16x24xf32>,
    return
  }
  func.func @transform_0(%arg0: i32) -> (i32, i32) {
    %c0_i32 = arith.constant 0 : i32
    %c0_i32_0 = arith.constant 0 : i32
    return %arg0, %c0_i32 : i32, i32
  }
  func.func @transform_1(%arg0: i32) -> (i32, i32) {
    %c0_i32 = arith.constant 0 : i32
    %c0_i32_0 = arith.constant 0 : i32
    %c0_i32_1 = arith.constant 0 : i32
    return %c0_i32, %c0_i32_0 : i32, i32
  }
  func.func @transform_2(%arg0: i32) -> (i32, i32) {
    %c0_i32 = arith.constant 0 : i32
    %c0_i32_0 = arith.constant 0 : i32
    %c0_i32_1 = arith.constant 0 : i32
    return %c0_i32, %c0_i32_0 : i32, i32
  }
  func.func @transform_3(%arg0: i32) -> (i32, i32) {
    %c0_i32 = arith.constant 0 : i32
    %c0_i32_0 = arith.constant 0 : i32
    %c0_i32_1 = arith.constant 0 : i32
    return %c0_i32, %c0_i32_0 : i32, i32
  }
  func.func @transform_4(%arg0: i32) -> (i32, i32) {
    %c0_i32 = arith.constant 0 : i32
    %c0_i32_0 = arith.constant 0 : i32
    %c0_i32_1 = arith.constant 0 : i32
    return %c0_i32, %c0_i32_0 : i32, i32
  }
  func.func @transform_5(%arg0: i32) -> (i32, i32) {
    %c0_i32 = arith.constant 0 : i32
    %c0_i32_0 = arith.constant 0 : i32
    %c0_i32_1 = arith.constant 0 : i32
    return %c0_i32, %c0_i32_0 : i32, i32
  }
  func.func @transform_6(%arg0: i32) -> (i32, i32) {
    %c0_i32 = arith.constant 0 : i32
    %c0_i32_0 = arith.constant 0 : i32
    %c0_i32_1 = arith.constant 0 : i32
    return %c0_i32, %c0_i32_0 : i32, i32
  }
  func.func @transform_7(%arg0: i32) -> (i32, i32) {
    %c0_i32 = arith.constant 0 : i32
    %c0_i32_0 = arith.constant 0 : i32
    %c0_i32_1 = arith.constant 0 : i32
    return %c0_i32, %c0_i32_0 : i32, i32
  }
  func.func @transform_8(%arg0: i32) -> (i32, i32) {
    %c0_i32 = arith.constant 0 : i32
    %c0_i32_0 = arith.constant 0 : i32
    return %arg0, %c0_i32 : i32, i32
  }
}

</mosaic_0001>

<llo_original>
// kernel: penn_forward.1
$region0: #{penn_forward.1}
  #allocation0 [shape = 'u32[]', space=smem, size = 0x4, offset = 0x4, fixed_abs, tag = 'smem constant byte address 0x4 - core index']
  #allocation1 [shape = 'u32[72,128]{1,0:T(1,128)}', space=vmem, size = 0x9000, scoped, tag = 'internal scratch']
  %s0 = inlined_call_operand.vmem [shape: f32[16,9], index: 0, kind: input, shape index: {}]
  %s1 = inlined_call_operand.vmem [shape: f32[9,32], index: 1, kind: input, shape index: {}]
  %s2 = inlined_call_operand.vmem [shape: f32[32,32], index: 2, kind: input, shape index: {}]
  %s3 = inlined_call_operand.vmem [shape: f32[32,16], index: 3, kind: input, shape index: {}]
  %s4 = inlined_call_operand.vmem [shape: f32[32,96], index: 4, kind: input, shape index: {}]
  %s5 = inlined_call_operand.vmem [shape: f32[96,96], index: 5, kind: input, shape index: {}]
  %s6 = inlined_call_operand.vmem [shape: f32[96,4], index: 6, kind: input, shape index: {}]
  %s7 = inlined_call_operand.vmem [shape: f32[8,96], index: 7, kind: input, shape index: {}]
  %s8 = inlined_call_operand.vmem [shape: f32[16,24], index: 8, kind: output, shape index: {}]
  %s9 = sld [smem:[#allocation0]]
  $region42: #{penn_forward.1} parent=0
    _
  %s11 = ssub.s32 1, %s9
  %s12 = scalar_select 0, %s11, %s9
  // Predicated region
  $region2: #{penn_forward.1} parent=0 // pred_check
    _
  $region3: #{penn_forward.1} parent=0 // pred_check_branch
    %14 = sbr.rel (0) target = $region5
  $region4: #{penn_forward.1} parent=0 // pred_region
    _
  $region5: #{penn_forward.1} parent=0 // pred_fallthru
    _
  // Predicated region
  $region6: #{penn_forward.1} parent=0 // pred_check
    _
  $region7: #{penn_forward.1} parent=0 // pred_check_branch
    %16 = sbr.rel (0) target = $region9
  $region8: #{penn_forward.1} parent=0 // pred_region
    _
  $region9: #{penn_forward.1} parent=0 // pred_fallthru
    _
  // Predicated region
  $region10: #{penn_forward.1} parent=0 // pred_check
    _
  $region11: #{penn_forward.1} parent=0 // pred_check_branch
    %18 = sbr.rel (0) target = $region13
  $region12: #{penn_forward.1} parent=0 // pred_region
    _
  $region13: #{penn_forward.1} parent=0 // pred_fallthru
    _
  // Predicated region
  $region14: #{penn_forward.1} parent=0 // pred_check
    _
  $region15: #{penn_forward.1} parent=0 // pred_check_branch
    %20 = sbr.rel (0) target = $region17
  $region16: #{penn_forward.1} parent=0 // pred_region
    _
  $region17: #{penn_forward.1} parent=0 // pred_fallthru
    _
  // Predicated region
  $region18: #{penn_forward.1} parent=0 // pred_check
    _
  $region19: #{penn_forward.1} parent=0 // pred_check_branch
    %22 = sbr.rel (0) target = $region21
  $region20: #{penn_forward.1} parent=0 // pred_region
    _
  $region21: #{penn_forward.1} parent=0 // pred_fallthru
    _
  // Predicated region
  $region22: #{penn_forward.1} parent=0 // pred_check
    _
  $region23: #{penn_forward.1} parent=0 // pred_check_branch
    %24 = sbr.rel (0) target = $region25
  $region24: #{penn_forward.1} parent=0 // pred_region
    _
  $region25: #{penn_forward.1} parent=0 // pred_fallthru
    _
  // Predicated region
  $region26: #{penn_forward.1} parent=0 // pred_check
    _
  $region27: #{penn_forward.1} parent=0 // pred_check_branch
    %26 = sbr.rel (0) target = $region29
  $region28: #{penn_forward.1} parent=0 // pred_region
    _
  $region29: #{penn_forward.1} parent=0 // pred_fallthru
    _
  // Predicated region
  $region30: #{penn_forward.1} parent=0 // pred_check
    _
  $region31: #{penn_forward.1} parent=0 // pred_check_branch
    %28 = sbr.rel (0) target = $region33
  $region32: #{penn_forward.1} parent=0 // pred_region
    _
  $region33: #{penn_forward.1} parent=0 // pred_fallthru
    _
  %v29 = vld [vmem:[%s0] sm:$0xff]
  %v30 = vld [vmem:[%s0 + $0x8] sm:$0xff]
  %v31 = vld [vmem:[%s7] sm:$0xff]
  %v32 = vld [vmem:[%s1] sm:$0xff]
  %v33 = vld [vmem:[%s1 + $0x8] sm:$0x1]
  %v34 = vperm.slane %v31, 0
  %vm35 = vcmask 72704
  %v37 = vsel %vm35, %v29, 0
  %v40 = vsel %vm35, %v30, 0
  %vm42 = vcmask 1040384
  %v44 = vsel %vm42, %v33, 0
  %46 = vmatpush.msra.mxu0 0.0
  %47 = vmatpush.msra.mxu0 0.0
  %48 = vmatpush.msra.mxu0 0.0
  %49 = vmatpush.msra.mxu0 0.0
  %50 = vmatpush.msra.mxu0 0.0
  %51 = vmatpush.msra.mxu0 0.0
  %52 = vmatpush.msra.mxu0 0.0
  %53 = vmatpush.msra.mxu0 0.0
  %54 = vmatpush.msra.mxu0 0.0
  %55 = vmatpush.msra.mxu0 0.0
  %56 = vmatpush.msra.mxu0 0.0
  %57 = vmatpush.msra.mxu0 0.0
  %58 = vmatpush.msra.mxu0 0.0
  %59 = vmatpush.msra.mxu0 0.0
  %60 = vmatpush.msra.mxu0 %v44
  %61 = vmatpush.msra.mxu0 %v32
  %62 = vmatmul.f32.gmra.mxu0 %v37
  %v63 = vpop.f32.mrf.mxu0
  %v64 = vadd.f32 %v34, %v63
  %65 = vmatmul.f32.gmra.mxu0 %v40
  %v66 = vpop.f32.mrf.mxu0
  %v67 = vadd.f32 %v34, %v66
  %68 = vdwg.mxu0
  %v69 = vmax.f32 %v64, 0.0
  %v70 = vmax.f32 %v67, 0.0
  %v71 = vld [vmem:[%s2] sm:$0xff]
  %v72 = vld [vmem:[%s2 + $0x8] sm:$0xff]
  %v73 = vld [vmem:[%s2 + $0x10] sm:$0xff]
  %v74 = vld [vmem:[%s2 + $0x18] sm:$0xff]
  %v75 = vperm.slane %v31, 1
  %vm76 = vcmask 261120
  %v78 = vsel %vm76, %v69, 0
  %v81 = vsel %vm76, %v70, 0
  %83 = vmatpush.msra.mxu0 0.0
  %84 = vmatpush.msra.mxu0 0.0
  %85 = vmatpush.msra.mxu0 0.0
  %86 = vmatpush.msra.mxu0 0.0
  %87 = vmatpush.msra.mxu0 0.0
  %88 = vmatpush.msra.mxu0 0.0
  %89 = vmatpush.msra.mxu0 0.0
  %90 = vmatpush.msra.mxu0 0.0
  %91 = vmatpush.msra.mxu0 0.0
  %92 = vmatpush.msra.mxu0 0.0
  %93 = vmatpush.msra.mxu0 0.0
  %94 = vmatpush.msra.mxu0 0.0
  %95 = vmatpush.msra.mxu0 %v74
  %96 = vmatpush.msra.mxu0 %v73
  %97 = vmatpush.msra.mxu0 %v72
  %98 = vmatpush.msra.mxu0 %v71
  %99 = vmatmul.f32.gmra.mxu0 %v78
  %v100 = vpop.f32.mrf.mxu0
  %v101 = vadd.f32 %v75, %v100
  %102 = vmatmul.f32.gmra.mxu0 %v81
  %v103 = vpop.f32.mrf.mxu0
  %v104 = vadd.f32 %v75, %v103
  %105 = vdwg.mxu0
  %v106 = vmax.f32 %v101, 0.0
  %v107 = vmax.f32 %v104, 0.0
  %v108 = vld [vmem:[%s3] sm:$0xff]
  %v109 = vld [vmem:[%s3 + $0x8] sm:$0xff]
  %v110 = vld [vmem:[%s3 + $0x10] sm:$0xff]
  %v111 = vld [vmem:[%s3 + $0x18] sm:$0xff]
  %v112 = vperm.slane %v31, 2
  %v114 = vsel %vm76, %v106, 0
  %v117 = vsel %vm76, %v107, 0
  %119 = vmatpush.msra.mxu0 0.0
  %120 = vmatpush.msra.mxu0 0.0
  %121 = vmatpush.msra.mxu0 0.0
  %122 = vmatpush.msra.mxu0 0.0
  %123 = vmatpush.msra.mxu0 0.0
  %124 = vmatpush.msra.mxu0 0.0
  %125 = vmatpush.msra.mxu0 0.0
  %126 = vmatpush.msra.mxu0 0.0
  %127 = vmatpush.msra.mxu0 0.0
  %128 = vmatpush.msra.mxu0 0.0
  %129 = vmatpush.msra.mxu0 0.0
  %130 = vmatpush.msra.mxu0 0.0
  %131 = vmatpush.msra.mxu0 %v111
  %132 = vmatpush.msra.mxu0 %v110
  %133 = vmatpush.msra.mxu0 %v109
  %134 = vmatpush.msra.mxu0 %v108
  %135 = vmatmul.f32.gmra.mxu0 %v114
  %v136 = vpop.f32.mrf.mxu0
  %v137 = vadd.f32 %v112, %v136
  %138 = vmatmul.f32.gmra.mxu0 %v117
  %v139 = vpop.f32.mrf.mxu0
  %v140 = vadd.f32 %v112, %v139
  %141 = vdwg.mxu0
  %v142 = vld [vmem:[%s4] sm:$0xff]
  %v143 = vld [vmem:[%s4 + $0x8] sm:$0xff]
  %v144 = vld [vmem:[%s4 + $0x10] sm:$0xff]
  %v145 = vld [vmem:[%s4 + $0x18] sm:$0xff]
  %v146 = vperm.slane %v31, 3
  %147 = vmatpush.msra.mxu0 0.0
  %148 = vmatpush.msra.mxu0 0.0
  %149 = vmatpush.msra.mxu0 0.0
  %150 = vmatpush.msra.mxu0 0.0
  %151 = vmatpush.msra.mxu0 0.0
  %152 = vmatpush.msra.mxu0 0.0
  %153 = vmatpush.msra.mxu0 0.0
  %154 = vmatpush.msra.mxu0 0.0
  %155 = vmatpush.msra.mxu0 0.0
  %156 = vmatpush.msra.mxu0 0.0
  %157 = vmatpush.msra.mxu0 0.0
  %158 = vmatpush.msra.mxu0 0.0
  %159 = vmatpush.msra.mxu0 %v145
  %160 = vmatpush.msra.mxu0 %v144
  %161 = vmatpush.msra.mxu0 %v143
  %162 = vmatpush.msra.mxu0 %v142
  %163 = vmatmul.f32.gmra.mxu0 %v114
  %v164 = vpop.f32.mrf.mxu0
  %v165 = vadd.f32 %v146, %v164
  %166 = vmatmul.f32.gmra.mxu0 %v117
  %v167 = vpop.f32.mrf.mxu0
  %v168 = vadd.f32 %v146, %v167
  %169 = vdwg.mxu0
  %vm170 = vcmp.ge.f32.partialorder %v165, 0.0
  %vm171 = vcmp.ge.f32.partialorder %v168, 0.0
  %v172 = vperm.slane %v31, 6
  %v173 = vmul.f32 %v172, %v165
  %v174 = vmul.f32 %v172, %v168
  %v175 = vsel %vm170, %v165, %v173
  %v176 = vsel %vm171, %v168, %v174
  %v177 = vld [vmem:[%s5] sm:$0xff]
  %v178 = vld [vmem:[%s5 + $0x8] sm:$0xff]
  %v179 = vld [vmem:[%s5 + $0x10] sm:$0xff]
  %v180 = vld [vmem:[%s5 + $0x18] sm:$0xff]
  %v181 = vld [vmem:[%s5 + $0x20] sm:$0xff]
  %v182 = vld [vmem:[%s5 + $0x28] sm:$0xff]
  %v183 = vld [vmem:[%s5 + $0x30] sm:$0xff]
  %v184 = vld [vmem:[%s5 + $0x38] sm:$0xff]
  %v185 = vld [vmem:[%s5 + $0x40] sm:$0xff]
  %v186 = vld [vmem:[%s5 + $0x48] sm:$0xff]
  %v187 = vld [vmem:[%s5 + $0x50] sm:$0xff]
  %v188 = vld [vmem:[%s5 + $0x58] sm:$0xff]
  %v189 = vperm.slane %v31, 4
  %vm190 = vcmask 785408
  %v192 = vsel %vm190, %v175, 0
  %v195 = vsel %vm190, %v176, 0
  %197 = vmatpush.msra.mxu0 0.0
  %198 = vmatpush.msra.mxu0 0.0
  %199 = vmatpush.msra.mxu0 0.0
  %200 = vmatpush.msra.mxu0 0.0
  %201 = vmatpush.msra.mxu0 %v188
  %202 = vmatpush.msra.mxu0 %v187
  %203 = vmatpush.msra.mxu0 %v186
  %204 = vmatpush.msra.mxu0 %v185
  %205 = vmatpush.msra.mxu0 %v184
  %206 = vmatpush.msra.mxu0 %v183
  %207 = vmatpush.msra.mxu0 %v182
  %208 = vmatpush.msra.mxu0 %v181
  %209 = vmatpush.msra.mxu0 %v180
  %210 = vmatpush.msra.mxu0 %v179
  %211 = vmatpush.msra.mxu0 %v178
  %212 = vmatpush.msra.mxu0 %v177
  %213 = vmatmul.f32.gmra.mxu0 %v192
  %v214 = vpop.f32.mrf.mxu0
  %v215 = vadd.f32 %v189, %v214
  %216 = vmatmul.f32.gmra.mxu0 %v195
  %v217 = vpop.f32.mrf.mxu0
  %v218 = vadd.f32 %v189, %v217
  %219 = vdwg.mxu0
  %vm220 = vcmp.ge.f32.partialorder %v215, 0.0
  %vm221 = vcmp.ge.f32.partialorder %v218, 0.0
  %v222 = vmul.f32 %v172, %v215
  %v223 = vmul.f32 %v172, %v218
  %v224 = vsel %vm220, %v215, %v222
  %v225 = vsel %vm221, %v218, %v223
  %v226 = vld [vmem:[%s6] sm:$0xff]
  %v227 = vld [vmem:[%s6 + $0x8] sm:$0xff]
  %v228 = vld [vmem:[%s6 + $0x10] sm:$0xff]
  %v229 = vld [vmem:[%s6 + $0x18] sm:$0xff]
  %v230 = vld [vmem:[%s6 + $0x20] sm:$0xff]
  %v231 = vld [vmem:[%s6 + $0x28] sm:$0xff]
  %v232 = vld [vmem:[%s6 + $0x30] sm:$0xff]
  %v233 = vld [vmem:[%s6 + $0x38] sm:$0xff]
  %v234 = vld [vmem:[%s6 + $0x40] sm:$0xff]
  %v235 = vld [vmem:[%s6 + $0x48] sm:$0xff]
  %v236 = vld [vmem:[%s6 + $0x50] sm:$0xff]
  %v237 = vld [vmem:[%s6 + $0x58] sm:$0xff]
  %v238 = vperm.slane %v31, 5
  %v240 = vsel %vm190, %v224, 0
  %v243 = vsel %vm190, %v225, 0
  %245 = vmatpush.msra.mxu0 0.0
  %246 = vmatpush.msra.mxu0 0.0
  %247 = vmatpush.msra.mxu0 0.0
  %248 = vmatpush.msra.mxu0 0.0
  %249 = vmatpush.msra.mxu0 %v237
  %250 = vmatpush.msra.mxu0 %v236
  %251 = vmatpush.msra.mxu0 %v235
  %252 = vmatpush.msra.mxu0 %v234
  %253 = vmatpush.msra.mxu0 %v233
  %254 = vmatpush.msra.mxu0 %v232
  %255 = vmatpush.msra.mxu0 %v231
  %256 = vmatpush.msra.mxu0 %v230
  %257 = vmatpush.msra.mxu0 %v229
  %258 = vmatpush.msra.mxu0 %v228
  %259 = vmatpush.msra.mxu0 %v227
  %260 = vmatpush.msra.mxu0 %v226
  %261 = vmatmul.f32.gmra.mxu0 %v240
  %v262 = vpop.f32.mrf.mxu0
  %v263 = vadd.f32 %v238, %v262
  %264 = vmatmul.f32.gmra.mxu0 %v243
  %v265 = vpop.f32.mrf.mxu0
  %v266 = vadd.f32 %v238, %v265
  %267 = vdwg.mxu0
  %vm268 = vcmp.ge.f32.partialorder %v263, 0.0
  %vm269 = vcmp.ge.f32.partialorder %v266, 0.0
  %v270 = vperm.slane %v31, 7
  %v271 = vmul.f32 %v270, %v263
  %v272 = vmul.f32 %v270, %v266
  %v273 = vsel %vm268, %v263, %v271
  %v274 = vsel %vm269, %v266, %v272
  %v275 = vsub.f32 %v29, 46.02
  %v276 = vsub.f32 %v30, 46.02
  %v277 = vrcp.pop %v275
  %v278 = vmul.f32 %v275, %v277
  %v279 = vsub.f32 1.0, %v278
  %v280 = vmul.f32 %v277, %v279
  %v281 = vadd.f32 %v277, %v280
  %vm282 = vweird.f32 %v275
  %vm283 = vweird.f32 %v277
  %vm284 = vmor %vm282, %vm283
  %v285 = vsel %vm284, %v277, %v281
  %v286 = vand.u32 2147483647, %v275
  %vm287 = vcmp.eq.f32.partialorder %v286, 8.507059e+37
  %v288 = vand.u32 %v275, 2147483648
  %v289 = vor.u32 1.1754944e-38, %v288
  %v290 = vsel %vm287, %v289, %v285
  %v291 = vrcp.pop %v276
  %v292 = vmul.f32 %v276, %v291
  %v293 = vsub.f32 1.0, %v292
  %v294 = vmul.f32 %v291, %v293
  %v295 = vadd.f32 %v291, %v294
  %vm296 = vweird.f32 %v276
  %vm297 = vweird.f32 %v291
  %vm298 = vmor %vm296, %vm297
  %v299 = vsel %vm298, %v291, %v295
  %v300 = vand.u32 2147483647, %v276
  %vm301 = vcmp.eq.f32.partialorder %v300, 8.507059e+37
  %v302 = vand.u32 %v276, 2147483648
  %v303 = vor.u32 1.1754944e-38, %v302
  %v304 = vsel %vm301, %v303, %v299
  %v305 = vsub.f32 -0.027762353, %v290
  %v306 = vsub.f32 -0.027762353, %v304
  %309 = vrot.lane.b32.xlu0 %v305, 122
  %v310 = vpop.permute.xlu0 %309
  %311 = vrot.lane.b32.xlu0 %v306, 122
  %v312 = vpop.permute.xlu0 %311
  %v315 = vmul.f32 %v273, %v310
  %v316 = vmul.f32 %v274, %v312
  %v317 = vmul.f32 %v315, 1.442695
  %v318 = vpow.pop %v317
  %v319 = vmul.f32 %v316, 1.442695
  %v320 = vpow.pop %v319
  %323 = vrot.lane.b32.xlu0 %v273, 1
  %v324 = vpop.permute.xlu0 %323
  %325 = vrot.lane.b32.xlu0 %v274, 1
  %v326 = vpop.permute.xlu0 %325
  %v329 = vmul.f32 %v273, %v324
  %v330 = vmul.f32 %v274, %v326
  %v331 = vmul.f32 %v290, %v290
  %v332 = vmul.f32 %v304, %v304
  %335 = vrot.lane.b32.xlu0 %v331, 123
  %v336 = vpop.permute.xlu0 %335
  %337 = vrot.lane.b32.xlu0 %v332, 123
  %v338 = vpop.permute.xlu0 %337
  %v341 = vmul.f32 %v329, %v336
  %v342 = vmul.f32 %v330, %v338
  %345 = vrot.lane.b32.xlu0 %v318, 1
  %v346 = vpop.permute.xlu0 %345
  %347 = vrot.lane.b32.xlu0 %v320, 1
  %v348 = vpop.permute.xlu0 %347
  %v351 = vmul.f32 %v341, %v346
  %v352 = vmul.f32 %v342, %v348
  %353 = vrot.lane.b32.xlu0 %v273, 2
  %v354 = vpop.permute.xlu0 %353
  %355 = vrot.lane.b32.xlu0 %v274, 2
  %v356 = vpop.permute.xlu0 %355
  %v359 = vmul.f32 %v351, %v354
  %v360 = vmul.f32 %v352, %v356
  %363 = vrot.lane.b32.xlu0 %v359, 1
  %v364 = vpop.permute.xlu0 %363
  %365 = vrot.lane.b32.xlu0 %v360, 1
  %v366 = vpop.permute.xlu0 %365
  %371 = vrot.lane.b32.xlu0 %v137, 8
  %v372 = vpop.permute.xlu0 %371
  %373 = vrot.lane.b32.xlu0 %v140, 8
  %v374 = vpop.permute.xlu0 %373
  %vm377 = vcmask 31744
  %v378 = vsel %vm377, %v273, %v364
  %v379 = vsel %vm377, %v274, %v366
  %vm380 = vcmask 39936
  %v381 = vsel %vm380, %v378, 0.0
  %v382 = vsel %vm380, %v379, 0.0
  %vm383 = vcmask 64512
  %v384 = vsel %vm383, %v381, %v372
  %v385 = vsel %vm383, %v382, %v374
  %vm386 = vcmask 195584
  %387 = vst.msk [vmem:[%s8] sm:$0xff] %vm386, %v384
  %388 = vst.msk [vmem:[%s8 + $0x8] sm:$0xff] %vm386, %v385
  // Predicated region
  $region34: #{penn_forward.1} parent=0 // pred_check
    _
  $region35: #{penn_forward.1} parent=0 // pred_check_branch
    %390 = sbr.rel (0) target = $region37
  $region36: #{penn_forward.1} parent=0 // pred_region
    _
  $region37: #{penn_forward.1} parent=0 // pred_fallthru
    _
  // Predicated region
  $region38: #{penn_forward.1} parent=0 // pred_check
    _
  $region39: #{penn_forward.1} parent=0 // pred_check_branch
    %392 = sbr.rel (0) target = $region41
  $region40: #{penn_forward.1} parent=0 // pred_region
    _
  $region41: #{penn_forward.1} parent=0 // pred_fallthru
    _

</llo_original>
